<compile_context>
chip_gen: v5e
topology: v5e:2x2
jax: 0.10.0
libtpu: 0.0.40
codegen_flags: <defaults>
</compile_context>

<pallas_src>
import math
import functools

import jax
import jax.numpy as jnp
from jax.experimental import pallas as pl
from jax.experimental.pallas import tpu as pltpu

NHEAD = 4
NDIM = 32
DFF = 64
LN_EPS = 1e-5


def encoder_block_kernel(x_ref, mask_ref,
                         g1_ref, bt1_ref,
                         wqk_ref, bqk_ref,
                         wvo_ref, bvo_ref, bo_ref,
                         g2_ref, bt2_ref,
                         w1_ref, bb1_ref, w2_ref, bb2_ref,
                         o_ref, *, seq_len):
    L = seq_len
    D = NDIM
    H = NHEAD
    dh = D // H
    scale = 1.0 / math.sqrt(dh)

    x = x_ref[...]                    # (R, D) f32 activations; R = BT*L rows
    R = x.shape[0]
    BT = R // L
    mask = mask_ref[...]              # (L, L) additive attention mask (f32)

    def layernorm(z, g, b):
        # single-pass: E[z] and E[z^2] together; var = E[z^2] - mu^2
        mu = jnp.mean(z, axis=-1, keepdims=True)
        ms = jnp.mean(z * z, axis=-1, keepdims=True)
        var = ms - mu * mu
        return (z - mu) * jax.lax.rsqrt(var + LN_EPS) * g + b

    # --- y = norm1(x) (f32 elementwise; only MXU operands are bf16) ---
    y = layernorm(x, g1_ref[...], bt1_ref[...])
    y_bf = y.astype(jnp.bfloat16)

    # --- fused Q/K projection: (R, D) x (D, 2D), bf16 operands, f32 accumulation ---
    qk = jnp.dot(y_bf, wqk_ref[...], preferred_element_type=jnp.float32) + bqk_ref[...]
    q = qk[:, :D].reshape(BT, L, D)
    k = qk[:, D:].reshape(BT, L, D)

    # --- V projection with W_out pre-folded per head (done wrapper-side):
    #     vt[:, h*D:(h+1)*D] = y @ (Wv_h @ Wo_h) + bv_h @ Wo_h
    #     so the per-head K=8 output-projection matmuls + ctx re-gather are gone. ---
    vt = jnp.dot(y_bf, wvo_ref[...], preferred_element_type=jnp.float32) + bvo_ref[...]
    vt = vt.reshape(BT, L, H * D)

    # --- multi-head attention: fold (head, batch-tile) into one dot_general batch dim ---
    qs = jnp.concatenate([q[:, :, h * dh:(h + 1) * dh] for h in range(H)], axis=0)   # (H*BT, L, dh)
    ks = jnp.concatenate([k[:, :, h * dh:(h + 1) * dh] for h in range(H)], axis=0)
    vts = jnp.concatenate([vt[:, :, h * D:(h + 1) * D] for h in range(H)], axis=0)   # (H*BT, L, D)

    s = jnp.einsum('bqd,bkd->bqk', qs.astype(jnp.bfloat16), ks.astype(jnp.bfloat16),
                   preferred_element_type=jnp.float32) * scale                        # (H*BT, L, L)
    s = s + mask[None, :, :]
    s = s - jnp.max(s, axis=-1, keepdims=True)
    p = jnp.exp(s)
    # approx reciprocal -> EUP slot instead of a VALU divide
    p = p * pl.reciprocal(jnp.sum(p, axis=-1, keepdims=True), approx=True)

    # P @ Vt already carries W_out: each head's context lands directly in output space.
    ctx = jnp.einsum('bqk,bkd->bqd', p.astype(jnp.bfloat16), vts.astype(jnp.bfloat16),
                     preferred_element_type=jnp.float32)                              # (H*BT, L, D)

    mha = bo_ref[...]                                                                 # (1, D) bcast
    for h in range(H):
        mha = mha + ctx[h * BT:(h + 1) * BT].reshape(R, D)
    x2 = x + mha

    # --- feed-forward (bf16 MXU operands, f32 accumulation / elementwise) ---
    y2 = layernorm(x2, g2_ref[...], bt2_ref[...])
    h1 = jnp.maximum(
        jnp.dot(y2.astype(jnp.bfloat16), w1_ref[...],
                preferred_element_type=jnp.float32) + bb1_ref[...], 0.0)
    # TODO(synk): dropout1/dropout2 treated as identity (eval mode).
    ffn = jnp.dot(h1.astype(jnp.bfloat16), w2_ref[...],
                  preferred_element_type=jnp.float32) + bb2_ref[...]

    o_ref[...] = x2 + ffn


def prepare_params(params):
    """One-time wrapper-side packing: fuse Wq/Wk, fold W_out into the V projection,
    and cast matmul weights to bf16 (biases / LN params stay f32)."""
    (g1, bt1, wq, bq, wk, bk, wv, bv, wo, bo, g2, bt2, w1, bb1, w2, bb2) = params
    D, H = NDIM, NHEAD
    dh = D // H
    wqk = jnp.concatenate([wq, wk], axis=1)                                   # (D, 2D)
    bqk = jnp.concatenate([bq, bk], axis=1)                                   # (1, 2D)
    # Fold W_out into V per head (computed in f32, then cast): lane-dense (D, H*D=128).
    wvo = jnp.concatenate(
        [wv[:, h * dh:(h + 1) * dh] @ wo[h * dh:(h + 1) * dh, :] for h in range(H)], axis=1)
    bvo = jnp.concatenate(
        [bv[:, h * dh:(h + 1) * dh] @ wo[h * dh:(h + 1) * dh, :] for h in range(H)], axis=1)
    return (g1.astype(jnp.float32), bt1.astype(jnp.float32),
            wqk.astype(jnp.bfloat16), bqk.astype(jnp.float32),
            wvo.astype(jnp.bfloat16), bvo.astype(jnp.float32),
            bo.astype(jnp.float32),
            g2.astype(jnp.float32), bt2.astype(jnp.float32),
            w1.astype(jnp.bfloat16), bb1.astype(jnp.float32),
            w2.astype(jnp.bfloat16), bb2.astype(jnp.float32))


def encoder_block(x, att_mask, prepared, *, batch_tile=128):
    B, L, D = x.shape
    assert D == NDIM
    (g1, bt1, wqk, bqk, wvo, bvo, bo, g2, bt2, w1, bb1, w2, bb2) = prepared

    # Batch tile: BT*L rows per grid step.  Keep >= 2 grid blocks whenever B >= 2 so
    # the "parallel" axis can shard across both v7x TensorCores, while still giving
    # the MXU a large M (up to batch_tile*L rows per step).  Pad batch if needed.
    if B >= 2:
        BT = max(1, min(batch_tile, -(-B // 2)))
    else:
        BT = 1
    n_blocks = -(-B // BT)
    Bp = n_blocks * BT
    R = BT * L

    x2d = x.reshape(B * L, D).astype(jnp.float32)
    if Bp != B:
        x2d = jnp.pad(x2d, ((0, (Bp - B) * L), (0, 0)))

    def full(shape):
        # Weights / mask: constant index map -> VMEM-resident across all grid steps
        # (tiny, <100 KB total; only the activation stream needs pipelining depth).
        return pl.BlockSpec(shape, lambda i, _n=len(shape): (0,) * _n)

    in_specs = [
        pl.BlockSpec((R, D), lambda i: (i, 0)),        # x: batch-tiled activation stream
        full((L, L)),                                  # att_mask
        full((1, D)), full((1, D)),                    # norm1 gamma/beta
        full((D, 2 * D)), full((1, 2 * D)),            # fused w_qk (bf16), b_qk (f32)
        full((D, NHEAD * D)), full((1, NHEAD * D)),    # W_out-folded V projection
        full((1, D)),                                  # b_out
        full((1, D)), full((1, D)),                    # norm2 gamma/beta
        full((D, DFF)), full((1, DFF)),                # ff1
        full((DFF, D)), full((1, D)),                  # ff2
    ]

    kernel = functools.partial(encoder_block_kernel, seq_len=L)

    out = pl.pallas_call(
        kernel,
        out_shape=jax.ShapeDtypeStruct((Bp * L, D), jnp.float32),
        grid_spec=pltpu.PrefetchScalarGridSpec(
            num_scalar_prefetch=0,
            grid=(n_blocks,),
            in_specs=in_specs,
            out_specs=pl.BlockSpec((R, D), lambda i: (i, 0)),
        ),
        compiler_params=pltpu.CompilerParams(dimension_semantics=("parallel",)),
    )(x2d, att_mask, g1, bt1, wqk, bqk, wvo, bvo, bo, g2, bt2, w1, bb1, w2, bb2)

    return out[:B * L].reshape(B, L, D)


# ----------------------- pure-JAX reference (for verification) -----------------------
def reference(x, att_mask, params):
    (g1, bt1, wq, bq, wk, bk, wv, bv, wo, bo, g2, bt2, w1, bb1, w2, bb2) = params
    dh = NDIM // NHEAD

    def ln(z, g, b):
        mu = jnp.mean(z, -1, keepdims=True)
        var = jnp.mean((z - mu) ** 2, -1, keepdims=True)
        return (z - mu) / jnp.sqrt(var + LN_EPS) * g + b

    y = ln(x, g1, bt1)
    q = y @ wq + bq
    k = y @ wk + bk
    v = y @ wv + bv
    B, L, D = x.shape
    qh = q.reshape(B, L, NHEAD, dh).transpose(0, 2, 1, 3)
    kh = k.reshape(B, L, NHEAD, dh).transpose(0, 2, 1, 3)
    vh = v.reshape(B, L, NHEAD, dh).transpose(0, 2, 1, 3)
    att = jnp.einsum('bhqd,bhkd->bhqk', qh, kh) / math.sqrt(dh) + att_mask
    att = jax.nn.softmax(att, axis=-1)
    o = jnp.einsum('bhqk,bhkd->bhqd', att, vh)
    o = o.transpose(0, 2, 1, 3).reshape(B, L, D)
    x2 = x + (o @ wo + bo)
    y2 = ln(x2, g2, bt2)
    ffn = jnp.maximum(y2 @ w1 + bb1, 0.0) @ w2 + bb2
    return x2 + ffn


if __name__ == "__main__":
    B, L, D = 2, 8, NDIM
    key = jax.random.PRNGKey(0)
    ks = jax.random.split(key, 20)

    def w(k, shape, scale=0.05):
        return (scale * jax.random.normal(k, shape)).astype(jnp.float32)

    x = w(ks[0], (B, L, D), scale=1.0)
    # causal additive mask (0 on/below diag, -1e9 above)
    att_mask = jnp.where(jnp.tril(jnp.ones((L, L), jnp.bool_)), 0.0, -1e9).astype(jnp.float32)
    # NOTE: padding_mask path in the PyTorch source is unreachable/buggy
    # (undefined `utils`, `self.nhead` missing on AttentionBlock); we run padding_mask=None.

    params = (
        jnp.ones((1, D), jnp.float32),            # norm1 gamma
        jnp.zeros((1, D), jnp.float32),           # norm1 beta
        w(ks[1], (D, D)), w(ks[2], (1, D)),       # w_q, b_q
        w(ks[3], (D, D)), w(ks[4], (1, D)),       # w_k, b_k
        w(ks[5], (D, D)), w(ks[6], (1, D)),       # w_v, b_v
        w(ks[7], (D, D)), w(ks[8], (1, D)),       # w_out, b_out
        jnp.ones((1, D), jnp.float32),            # norm2 gamma
        jnp.zeros((1, D), jnp.float32),           # norm2 beta
        w(ks[9], (D, DFF)), w(ks[10], (1, DFF)),  # ff1
        w(ks[11], (DFF, D)), w(ks[12], (1, D)),   # ff2
    )

    prepared = prepare_params(params)             # one-time fusion / bf16 cast
    out = encoder_block(x, att_mask, prepared)
    out = jax.block_until_ready(out)

    ref = reference(x, att_mask, params)
    assert out.shape == (B, L, D)
    # tolerance 3e-2: bf16 MXU operands + approx EUP reciprocal in the softmax
    assert jnp.allclose(out, ref, atol=3e-2, rtol=3e-2), float(jnp.max(jnp.abs(out - ref)))
    print("KERNEL_OK")
</pallas_src>

<mosaic_0001>
module attributes {stable_mosaic.version = 11 : i64} {
  func.func @encoder_block_kernel(%arg0: i32, %arg1: memref<8x32xf32, #tpu.memory_space<vmem>>, %arg2: memref<8x8xf32, #tpu.memory_space<vmem>>, %arg3: memref<1x32xf32, #tpu.memory_space<vmem>>, %arg4: memref<1x32xf32, #tpu.memory_space<vmem>>, %arg5: memref<32x64xbf16, #tpu.memory_space<vmem>>, %arg6: memref<1x64xf32, #tpu.memory_space<vmem>>, %arg7: memref<32x128xbf16, #tpu.memory_space<vmem>>, %arg8: memref<1x128xf32, #tpu.memory_space<vmem>>, %arg9: memref<1x32xf32, #tpu.memory_space<vmem>>, %arg10: memref<1x32xf32, #tpu.memory_space<vmem>>, %arg11: memref<1x32xf32, #tpu.memory_space<vmem>>, %arg12: memref<32x64xbf16, #tpu.memory_space<vmem>>, %arg13: memref<1x64xf32, #tpu.memory_space<vmem>>, %arg14: memref<64x32xbf16, #tpu.memory_space<vmem>>, %arg15: memref<1x32xf32, #tpu.memory_space<vmem>>, %arg16: memref<8x32xf32, #tpu.memory_space<vmem>>) attributes {dimension_semantics = [#tpu.dimension_semantics<parallel>], iteration_bounds = array<i64: 2>, scalar_prefetch = 0 : i64, scratch_operands = 0 : i64, tpu.core_type = #tpu.core_type<tc>, window_params = [{transform_indices = @transform_0, window_bounds = array<i64: 8, 32>}, {pipeline_mode = #tpu.pipeline_mode<synchronous>, transform_indices = @transform_1, window_bounds = array<i64: 8, 8>}, {pipeline_mode = #tpu.pipeline_mode<synchronous>, transform_indices = @transform_2, window_bounds = array<i64: 1, 32>}, {pipeline_mode = #tpu.pipeline_mode<synchronous>, transform_indices = @transform_3, window_bounds = array<i64: 1, 32>}, {pipeline_mode = #tpu.pipeline_mode<synchronous>, transform_indices = @transform_4, window_bounds = array<i64: 32, 64>}, {pipeline_mode = #tpu.pipeline_mode<synchronous>, transform_indices = @transform_5, window_bounds = array<i64: 1, 64>}, {pipeline_mode = #tpu.pipeline_mode<synchronous>, transform_indices = @transform_6, window_bounds = array<i64: 32, 128>}, {pipeline_mode = #tpu.pipeline_mode<synchronous>, transform_indices = @transform_7, window_bounds = array<i64: 1, 128>}, {pipeline_mode = #tpu.pipeline_mode<synchronous>, transform_indices = @transform_8, window_bounds = array<i64: 1, 32>}, {pipeline_mode = #tpu.pipeline_mode<synchronous>, transform_indices = @transform_9, window_bounds = array<i64: 1, 32>}, {pipeline_mode = #tpu.pipeline_mode<synchronous>, transform_indices = @transform_10, window_bounds = array<i64: 1, 32>}, {pipeline_mode = #tpu.pipeline_mode<synchronous>, transform_indices = @transform_11, window_bounds = array<i64: 32, 64>}, {pipeline_mode = #tpu.pipeline_mode<synchronous>, transform_indices = @transform_12, window_bounds = array<i64: 1, 64>}, {pipeline_mode = #tpu.pipeline_mode<synchronous>, transform_indices = @transform_13, window_bounds = array<i64: 64, 32>}, {pipeline_mode = #tpu.pipeline_mode<synchronous>, transform_indices = @transform_14, window_bounds = array<i64: 1, 32>}, {transform_indices = @transform_15, window_bounds = array<i64: 8, 32>}]} {
    %c0 = arith.constant 0 : index
    %c0_0 = arith.constant 0 : index
    %0 = vector.load %arg1[%c0, %c0_0] : memref<8x32xf32, #tpu.memory_space<vmem>>, vector<8x32xf32>
    %c0_1 = arith.constant 0 : index
    %c0_2 = arith.constant 0 : index
    %1 = vector.load %arg2[%c0_1, %c0_2] : memref<8x8xf32, #tpu.memory_space<vmem>>, vector<8x8xf32>
    %c0_3 = arith.constant 0 : index
    %c0_4 = arith.constant 0 : index
    %2 = vector.load %arg3[%c0_3, %c0_4] : memref<1x32xf32, #tpu.memory_space<vmem>>, vector<1x32xf32>
    %c0_5 = arith.constant 0 : index
    %c0_6 = arith.constant 0 : index
    %3 = vector.load %arg4[%c0_5, %c0_6] : memref<1x32xf32, #tpu.memory_space<vmem>>, vector<1x32xf32>
    %cst = arith.constant dense<0.000000e+00> : vector<8xf32>
    %4 = vector.multi_reduction <add>, %0, %cst [1] : vector<8x32xf32> to vector<8xf32>
    %5 = vector.shape_cast %4 : vector<8xf32> to vector<8x1xf32>
    %cst_7 = arith.constant 3.200000e+01 : f32
    %6 = vector.broadcast %cst_7 : f32 to vector<8x1xf32>
    %7 = arith.divf %5, %6 : vector<8x1xf32>
    %8 = arith.mulf %0, %0 : vector<8x32xf32>
    %cst_8 = arith.constant dense<0.000000e+00> : vector<8xf32>
    %9 = vector.multi_reduction <add>, %8, %cst_8 [1] : vector<8x32xf32> to vector<8xf32>
    %10 = vector.shape_cast %9 : vector<8xf32> to vector<8x1xf32>
    %cst_9 = arith.constant 3.200000e+01 : f32
    %11 = vector.broadcast %cst_9 : f32 to vector<8x1xf32>
    %12 = arith.divf %10, %11 : vector<8x1xf32>
    %13 = arith.mulf %7, %7 : vector<8x1xf32>
    %14 = arith.subf %12, %13 : vector<8x1xf32>
    %15 = vector.broadcast %7 : vector<8x1xf32> to vector<8x32xf32>
    %16 = arith.subf %0, %15 : vector<8x32xf32>
    %cst_10 = arith.constant 9.99999974E-6 : f32
    %17 = vector.broadcast %cst_10 : f32 to vector<8x1xf32>
    %18 = arith.addf %14, %17 : vector<8x1xf32>
    %19 = math.rsqrt %18 : vector<8x1xf32>
    %20 = vector.broadcast %19 : vector<8x1xf32> to vector<8x32xf32>
    %21 = arith.mulf %16, %20 : vector<8x32xf32>
    %22 = vector.broadcast %2 : vector<1x32xf32> to vector<8x32xf32>
    %23 = arith.mulf %21, %22 : vector<8x32xf32>
    %24 = vector.broadcast %3 : vector<1x32xf32> to vector<8x32xf32>
    %25 = arith.addf %23, %24 : vector<8x32xf32>
    %26 = arith.truncf %25 : vector<8x32xf32> to vector<8x32xbf16>
    %c0_11 = arith.constant 0 : index
    %c0_12 = arith.constant 0 : index
    %27 = vector.load %arg5[%c0_11, %c0_12] : memref<32x64xbf16, #tpu.memory_space<vmem>>, vector<32x64xbf16>
    %cst_13 = arith.constant dense<0.000000e+00> : vector<8x64xf32>
    %28 = tpu.matmul %26, %27, %cst_13 {dimension_numbers = #tpu.dot_dimension_numbers<[1], [0], [0], [1], [0, 0, 1, 1], [], []>} : vector<8x32xbf16>, vector<32x64xbf16>, vector<8x64xf32> -> vector<8x64xf32>
    %c0_14 = arith.constant 0 : index
    %c0_15 = arith.constant 0 : index
    %29 = vector.load %arg6[%c0_14, %c0_15] : memref<1x64xf32, #tpu.memory_space<vmem>>, vector<1x64xf32>
    %30 = vector.broadcast %29 : vector<1x64xf32> to vector<8x64xf32>
    %31 = arith.addf %28, %30 : vector<8x64xf32>
    %32 = vector.extract_strided_slice %31 {offsets = [0, 0], sizes = [8, 32], strides = [1, 1]} : vector<8x64xf32> to vector<8x32xf32>
    %33 = vector.shape_cast %32 : vector<8x32xf32> to vector<1x8x32xf32>
    %34 = vector.extract_strided_slice %31 {offsets = [0, 32], sizes = [8, 32], strides = [1, 1]} : vector<8x64xf32> to vector<8x32xf32>
    %35 = vector.shape_cast %34 : vector<8x32xf32> to vector<1x8x32xf32>
    %c0_16 = arith.constant 0 : index
    %c0_17 = arith.constant 0 : index
    %36 = vector.load %arg7[%c0_16, %c0_17] : memref<32x128xbf16, #tpu.memory_space<vmem>>, vector<32x128xbf16>
    %cst_18 = arith.constant dense<0.000000e+00> : vector<8x128xf32>
    %37 = tpu.matmul %26, %36, %cst_18 {dimension_numbers = #tpu.dot_dimension_numbers<[1], [0], [0], [1], [0, 0, 1, 1], [], []>} : vector<8x32xbf16>, vector<32x128xbf16>, vector<8x128xf32> -> vector<8x128xf32>
    %c0_19 = arith.constant 0 : index
    %c0_20 = arith.constant 0 : index
    %38 = vector.load %arg8[%c0_19, %c0_20] : memref<1x128xf32, #tpu.memory_space<vmem>>, vector<1x128xf32>
    %39 = vector.broadcast %38 : vector<1x128xf32> to vector<8x128xf32>
    %40 = arith.addf %37, %39 : vector<8x128xf32>
    %41 = vector.shape_cast %40 : vector<8x128xf32> to vector<1x8x128xf32>
    %42 = vector.extract_strided_slice %33 {offsets = [0, 0, 0], sizes = [1, 8, 8], strides = [1, 1, 1]} : vector<1x8x32xf32> to vector<1x8x8xf32>
    %43 = vector.extract_strided_slice %33 {offsets = [0, 0, 8], sizes = [1, 8, 8], strides = [1, 1, 1]} : vector<1x8x32xf32> to vector<1x8x8xf32>
    %44 = vector.extract_strided_slice %33 {offsets = [0, 0, 16], sizes = [1, 8, 8], strides = [1, 1, 1]} : vector<1x8x32xf32> to vector<1x8x8xf32>
    %45 = vector.extract_strided_slice %33 {offsets = [0, 0, 24], sizes = [1, 8, 8], strides = [1, 1, 1]} : vector<1x8x32xf32> to vector<1x8x8xf32>
    %46 = tpu.concatenate %42, %43, %44, %45 in 0 : vector<1x8x8xf32>, vector<1x8x8xf32>, vector<1x8x8xf32>, vector<1x8x8xf32> -> vector<4x8x8xf32>
    %47 = vector.extract_strided_slice %35 {offsets = [0, 0, 0], sizes = [1, 8, 8], strides = [1, 1, 1]} : vector<1x8x32xf32> to vector<1x8x8xf32>
    %48 = vector.extract_strided_slice %35 {offsets = [0, 0, 8], sizes = [1, 8, 8], strides = [1, 1, 1]} : vector<1x8x32xf32> to vector<1x8x8xf32>
    %49 = vector.extract_strided_slice %35 {offsets = [0, 0, 16], sizes = [1, 8, 8], strides = [1, 1, 1]} : vector<1x8x32xf32> to vector<1x8x8xf32>
    %50 = vector.extract_strided_slice %35 {offsets = [0, 0, 24], sizes = [1, 8, 8], strides = [1, 1, 1]} : vector<1x8x32xf32> to vector<1x8x8xf32>
    %51 = tpu.concatenate %47, %48, %49, %50 in 0 : vector<1x8x8xf32>, vector<1x8x8xf32>, vector<1x8x8xf32>, vector<1x8x8xf32> -> vector<4x8x8xf32>
    %52 = vector.extract_strided_slice %41 {offsets = [0, 0, 0], sizes = [1, 8, 32], strides = [1, 1, 1]} : vector<1x8x128xf32> to vector<1x8x32xf32>
    %53 = vector.extract_strided_slice %41 {offsets = [0, 0, 32], sizes = [1, 8, 32], strides = [1, 1, 1]} : vector<1x8x128xf32> to vector<1x8x32xf32>
    %54 = vector.extract_strided_slice %41 {offsets = [0, 0, 64], sizes = [1, 8, 32], strides = [1, 1, 1]} : vector<1x8x128xf32> to vector<1x8x32xf32>
    %55 = vector.extract_strided_slice %41 {offsets = [0, 0, 96], sizes = [1, 8, 32], strides = [1, 1, 1]} : vector<1x8x128xf32> to vector<1x8x32xf32>
    %56 = tpu.concatenate %52, %53, %54, %55 in 0 : vector<1x8x32xf32>, vector<1x8x32xf32>, vector<1x8x32xf32>, vector<1x8x32xf32> -> vector<4x8x32xf32>
    %57 = arith.truncf %46 : vector<4x8x8xf32> to vector<4x8x8xbf16>
    %58 = arith.truncf %51 : vector<4x8x8xf32> to vector<4x8x8xbf16>
    "tpu.trace_start"() <{level = 10 : i32, message = "bqd,bkd->bqk"}> : () -> ()
    %cst_21 = arith.constant dense<0.000000e+00> : vector<4x8x8xf32>
    %59 = tpu.matmul %57, %58, %cst_21 {dimension_numbers = #tpu.dot_dimension_numbers<[2], [2], [1], [1], [0, 0, 0, 1, 1, 1], [0], [0]>} : vector<4x8x8xbf16>, vector<4x8x8xbf16>, vector<4x8x8xf32> -> vector<4x8x8xf32>
    "tpu.trace_stop"() : () -> ()
    %cst_22 = arith.constant 0.353553385 : f32
    %60 = vector.broadcast %cst_22 : f32 to vector<4x8x8xf32>
    %61 = arith.mulf %59, %60 : vector<4x8x8xf32>
    %62 = vector.shape_cast %1 : vector<8x8xf32> to vector<1x8x8xf32>
    %63 = vector.broadcast %62 : vector<1x8x8xf32> to vector<4x8x8xf32>
    %64 = arith.addf %61, %63 : vector<4x8x8xf32>
    %cst_23 = arith.constant dense<0xFF800000> : vector<4x8xf32>
    %65 = vector.multi_reduction <maximumf>, %64, %cst_23 [2] : vector<4x8x8xf32> to vector<4x8xf32>
    %66 = vector.shape_cast %65 : vector<4x8xf32> to vector<4x8x1xf32>
    %67 = vector.broadcast %66 : vector<4x8x1xf32> to vector<4x8x8xf32>
    %68 = arith.subf %64, %67 : vector<4x8x8xf32>
    %69 = math.exp %68 : vector<4x8x8xf32>
    %cst_24 = arith.constant dense<0.000000e+00> : vector<4x8xf32>
    %70 = vector.multi_reduction <add>, %69, %cst_24 [2] : vector<4x8x8xf32> to vector<4x8xf32>
    %71 = vector.shape_cast %70 : vector<4x8xf32> to vector<4x8x1xf32>
    %72 = tpu.reciprocal %71 {approx = true} : vector<4x8x1xf32> -> vector<4x8x1xf32>
    %73 = vector.broadcast %72 : vector<4x8x1xf32> to vector<4x8x8xf32>
    %74 = arith.mulf %69, %73 : vector<4x8x8xf32>
    %75 = arith.truncf %74 : vector<4x8x8xf32> to vector<4x8x8xbf16>
    %76 = arith.truncf %56 : vector<4x8x32xf32> to vector<4x8x32xbf16>
    "tpu.trace_start"() <{level = 10 : i32, message = "bqk,bkd->bqd"}> : () -> ()
    %cst_25 = arith.constant dense<0.000000e+00> : vector<4x8x32xf32>
    %77 = tpu.matmul %75, %76, %cst_25 {dimension_numbers = #tpu.dot_dimension_numbers<[2], [1], [1], [2], [0, 0, 0, 1, 1, 2], [0], [0]>} : vector<4x8x8xbf16>, vector<4x8x32xbf16>, vector<4x8x32xf32> -> vector<4x8x32xf32>
    "tpu.trace_stop"() : () -> ()
    %c0_26 = arith.constant 0 : index
    %c0_27 = arith.constant 0 : index
    %78 = vector.load %arg9[%c0_26, %c0_27] : memref<1x32xf32, #tpu.memory_space<vmem>>, vector<1x32xf32>
    %79 = vector.extract_strided_slice %77 {offsets = [0, 0, 0], sizes = [1, 8, 32], strides = [1, 1, 1]} : vector<4x8x32xf32> to vector<1x8x32xf32>
    %80 = vector.shape_cast %79 : vector<1x8x32xf32> to vector<8x32xf32>
    %81 = vector.broadcast %78 : vector<1x32xf32> to vector<8x32xf32>
    %82 = arith.addf %81, %80 : vector<8x32xf32>
    %83 = vector.extract_strided_slice %77 {offsets = [1, 0, 0], sizes = [1, 8, 32], strides = [1, 1, 1]} : vector<4x8x32xf32> to vector<1x8x32xf32>
    %84 = vector.shape_cast %83 : vector<1x8x32xf32> to vector<8x32xf32>
    %85 = arith.addf %82, %84 : vector<8x32xf32>
    %86 = vector.extract_strided_slice %77 {offsets = [2, 0, 0], sizes = [1, 8, 32], strides = [1, 1, 1]} : vector<4x8x32xf32> to vector<1x8x32xf32>
    %87 = vector.shape_cast %86 : vector<1x8x32xf32> to vector<8x32xf32>
    %88 = arith.addf %85, %87 : vector<8x32xf32>
    %89 = vector.extract_strided_slice %77 {offsets = [3, 0, 0], sizes = [1, 8, 32], strides = [1, 1, 1]} : vector<4x8x32xf32> to vector<1x8x32xf32>
    %90 = vector.shape_cast %89 : vector<1x8x32xf32> to vector<8x32xf32>
    %91 = arith.addf %88, %90 : vector<8x32xf32>
    %92 = arith.addf %0, %91 : vector<8x32xf32>
    %c0_28 = arith.constant 0 : index
    %c0_29 = arith.constant 0 : index
    %93 = vector.load %arg10[%c0_28, %c0_29] : memref<1x32xf32, #tpu.memory_space<vmem>>, vector<1x32xf32>
    %c0_30 = arith.constant 0 : index
    %c0_31 = arith.constant 0 : index
    %94 = vector.load %arg11[%c0_30, %c0_31] : memref<1x32xf32, #tpu.memory_space<vmem>>, vector<1x32xf32>
    %cst_32 = arith.constant dense<0.000000e+00> : vector<8xf32>
    %95 = vector.multi_reduction <add>, %92, %cst_32 [1] : vector<8x32xf32> to vector<8xf32>
    %96 = vector.shape_cast %95 : vector<8xf32> to vector<8x1xf32>
    %cst_33 = arith.constant 3.200000e+01 : f32
    %97 = vector.broadcast %cst_33 : f32 to vector<8x1xf32>
    %98 = arith.divf %96, %97 : vector<8x1xf32>
    %99 = arith.mulf %92, %92 : vector<8x32xf32>
    %cst_34 = arith.constant dense<0.000000e+00> : vector<8xf32>
    %100 = vector.multi_reduction <add>, %99, %cst_34 [1] : vector<8x32xf32> to vector<8xf32>
    %101 = vector.shape_cast %100 : vector<8xf32> to vector<8x1xf32>
    %cst_35 = arith.constant 3.200000e+01 : f32
    %102 = vector.broadcast %cst_35 : f32 to vector<8x1xf32>
    %103 = arith.divf %101, %102 : vector<8x1xf32>
    %104 = arith.mulf %98, %98 : vector<8x1xf32>
    %105 = arith.subf %103, %104 : vector<8x1xf32>
    %106 = vector.broadcast %98 : vector<8x1xf32> to vector<8x32xf32>
    %107 = arith.subf %92, %106 : vector<8x32xf32>
    %cst_36 = arith.constant 9.99999974E-6 : f32
    %108 = vector.broadcast %cst_36 : f32 to vector<8x1xf32>
    %109 = arith.addf %105, %108 : vector<8x1xf32>
    %110 = math.rsqrt %109 : vector<8x1xf32>
    %111 = vector.broadcast %110 : vector<8x1xf32> to vector<8x32xf32>
    %112 = arith.mulf %107, %111 : vector<8x32xf32>
    %113 = vector.broadcast %93 : vector<1x32xf32> to vector<8x32xf32>
    %114 = arith.mulf %112, %113 : vector<8x32xf32>
    %115 = vector.broadcast %94 : vector<1x32xf32> to vector<8x32xf32>
    %116 = arith.addf %114, %115 : vector<8x32xf32>
    %117 = arith.truncf %116 : vector<8x32xf32> to vector<8x32xbf16>
    %c0_37 = arith.constant 0 : index
    %c0_38 = arith.constant 0 : index
    %118 = vector.load %arg12[%c0_37, %c0_38] : memref<32x64xbf16, #tpu.memory_space<vmem>>, vector<32x64xbf16>
    %cst_39 = arith.constant dense<0.000000e+00> : vector<8x64xf32>
    %119 = tpu.matmul %117, %118, %cst_39 {dimension_numbers = #tpu.dot_dimension_numbers<[1], [0], [0], [1], [0, 0, 1, 1], [], []>} : vector<8x32xbf16>, vector<32x64xbf16>, vector<8x64xf32> -> vector<8x64xf32>
    %c0_40 = arith.constant 0 : index
    %c0_41 = arith.constant 0 : index
    %120 = vector.load %arg13[%c0_40, %c0_41] : memref<1x64xf32, #tpu.memory_space<vmem>>, vector<1x64xf32>
    %121 = vector.broadcast %120 : vector<1x64xf32> to vector<8x64xf32>
    %122 = arith.addf %119, %121 : vector<8x64xf32>
    %cst_42 = arith.constant 0.000000e+00 : f32
    %123 = vector.broadcast %cst_42 : f32 to vector<8x64xf32>
    %124 = arith.maximumf %122, %123 : vector<8x64xf32>
    %125 = arith.truncf %124 : vector<8x64xf32> to vector<8x64xbf16>
    %c0_43 = arith.constant 0 : index
    %c0_44 = arith.constant 0 : index
    %126 = vector.load %arg14[%c0_43, %c0_44] : memref<64x32xbf16, #tpu.memory_space<vmem>>, vector<64x32xbf16>
    %cst_45 = arith.constant dense<0.000000e+00> : vector<8x32xf32>
    %127 = tpu.matmul %125, %126, %cst_45 {dimension_numbers = #tpu.dot_dimension_numbers<[1], [0], [0], [1], [0, 0, 1, 1], [], []>} : vector<8x64xbf16>, vector<64x32xbf16>, vector<8x32xf32> -> vector<8x32xf32>
    %c0_46 = arith.constant 0 : index
    %c0_47 = arith.constant 0 : index
    %128 = vector.load %arg15[%c0_46, %c0_47] : memref<1x32xf32, #tpu.memory_space<vmem>>, vector<1x32xf32>
    %129 = vector.broadcast %128 : vector<1x32xf32> to vector<8x32xf32>
    %130 = arith.addf %127, %129 : vector<8x32xf32>
    %131 = arith.addf %92, %130 : vector<8x32xf32>
    %c0_48 = arith.constant 0 : index
    %c0_49 = arith.constant 0 : index
    %132 = vector.load %arg16[%c0_48, %c0_49] : memref<8x32xf32, #tpu.memory_space<vmem>>, vector<8x32xf32>
    tpu.vector_store %arg16[%c0_48, %c0_49], %131 {strides = array<i32>} : memref<8x32xf32, #tpu.memory_space<vmem>>, vector<8x32xf32>,
    return
  }
  func.func @transform_0(%arg0: i32) -> (i32, i32) {
    %c0_i32 = arith.constant 0 : i32
    %c0_i32_0 = arith.constant 0 : i32
    return %arg0, %c0_i32 : i32, i32
  }
  func.func @transform_1(%arg0: i32) -> (i32, i32) {
    %c0_i32 = arith.constant 0 : i32
    %c0_i32_0 = arith.constant 0 : i32
    %c0_i32_1 = arith.constant 0 : i32
    return %c0_i32, %c0_i32_0 : i32, i32
  }
  func.func @transform_2(%arg0: i32) -> (i32, i32) {
    %c0_i32 = arith.constant 0 : i32
    %c0_i32_0 = arith.constant 0 : i32
    %c0_i32_1 = arith.constant 0 : i32
    return %c0_i32, %c0_i32_0 : i32, i32
  }
  func.func @transform_3(%arg0: i32) -> (i32, i32) {
    %c0_i32 = arith.constant 0 : i32
    %c0_i32_0 = arith.constant 0 : i32
    %c0_i32_1 = arith.constant 0 : i32
    return %c0_i32, %c0_i32_0 : i32, i32
  }
  func.func @transform_4(%arg0: i32) -> (i32, i32) {
    %c0_i32 = arith.constant 0 : i32
    %c0_i32_0 = arith.constant 0 : i32
    %c0_i32_1 = arith.constant 0 : i32
    return %c0_i32, %c0_i32_0 : i32, i32
  }
  func.func @transform_5(%arg0: i32) -> (i32, i32) {
    %c0_i32 = arith.constant 0 : i32
    %c0_i32_0 = arith.constant 0 : i32
    %c0_i32_1 = arith.constant 0 : i32
    return %c0_i32, %c0_i32_0 : i32, i32
  }
  func.func @transform_6(%arg0: i32) -> (i32, i32) {
    %c0_i32 = arith.constant 0 : i32
    %c0_i32_0 = arith.constant 0 : i32
    %c0_i32_1 = arith.constant 0 : i32
    return %c0_i32, %c0_i32_0 : i32, i32
  }
  func.func @transform_7(%arg0: i32) -> (i32, i32) {
    %c0_i32 = arith.constant 0 : i32
    %c0_i32_0 = arith.constant 0 : i32
    %c0_i32_1 = arith.constant 0 : i32
    return %c0_i32, %c0_i32_0 : i32, i32
  }
  func.func @transform_8(%arg0: i32) -> (i32, i32) {
    %c0_i32 = arith.constant 0 : i32
    %c0_i32_0 = arith.constant 0 : i32
    %c0_i32_1 = arith.constant 0 : i32
    return %c0_i32, %c0_i32_0 : i32, i32
  }
  func.func @transform_9(%arg0: i32) -> (i32, i32) {
    %c0_i32 = arith.constant 0 : i32
    %c0_i32_0 = arith.constant 0 : i32
    %c0_i32_1 = arith.constant 0 : i32
    return %c0_i32, %c0_i32_0 : i32, i32
  }
  func.func @transform_10(%arg0: i32) -> (i32, i32) {
    %c0_i32 = arith.constant 0 : i32
    %c0_i32_0 = arith.constant 0 : i32
    %c0_i32_1 = arith.constant 0 : i32
    return %c0_i32, %c0_i32_0 : i32, i32
  }
  func.func @transform_11(%arg0: i32) -> (i32, i32) {
    %c0_i32 = arith.constant 0 : i32
    %c0_i32_0 = arith.constant 0 : i32
    %c0_i32_1 = arith.constant 0 : i32
    return %c0_i32, %c0_i32_0 : i32, i32
  }
  func.func @transform_12(%arg0: i32) -> (i32, i32) {
    %c0_i32 = arith.constant 0 : i32
    %c0_i32_0 = arith.constant 0 : i32
    %c0_i32_1 = arith.constant 0 : i32
    return %c0_i32, %c0_i32_0 : i32, i32
  }
  func.func @transform_13(%arg0: i32) -> (i32, i32) {
    %c0_i32 = arith.constant 0 : i32
    %c0_i32_0 = arith.constant 0 : i32
    %c0_i32_1 = arith.constant 0 : i32
    return %c0_i32, %c0_i32_0 : i32, i32
  }
  func.func @transform_14(%arg0: i32) -> (i32, i32) {
    %c0_i32 = arith.constant 0 : i32
    %c0_i32_0 = arith.constant 0 : i32
    %c0_i32_1 = arith.constant 0 : i32
    return %c0_i32, %c0_i32_0 : i32, i32
  }
  func.func @transform_15(%arg0: i32) -> (i32, i32) {
    %c0_i32 = arith.constant 0 : i32
    %c0_i32_0 = arith.constant 0 : i32
    return %arg0, %c0_i32 : i32, i32
  }
}

</mosaic_0001>

<llo_original>
// kernel: tpu_custom_call.1
$region0: #{tpu_custom_call.1}
  #allocation0 [shape = 'u32[]', space=smem, size = 0x4, offset = 0x4, fixed_abs, tag = 'smem constant byte address 0x4 - core index']
  #allocation1 [shape = 'u32[72,128]{1,0:T(1,128)}', space=vmem, size = 0x9000, scoped, tag = 'internal scratch']
  %s0 = inlined_call_operand.vmem [shape: f32[16,32], index: 0, kind: input, shape index: {}]
  %s1 = inlined_call_operand.hbm [shape: f32[8,8], index: 1, kind: input, shape index: {}]
  %s2 = inlined_call_operand.vmem [shape: f32[1,32], index: 2, kind: input, shape index: {}]
  %s3 = inlined_call_operand.vmem [shape: f32[1,32], index: 3, kind: input, shape index: {}]
  %s4 = inlined_call_operand.vmem [shape: bf16[32,64], index: 4, kind: input, shape index: {}]
  %s5 = inlined_call_operand.vmem [shape: f32[1,64], index: 5, kind: input, shape index: {}]
  %s6 = inlined_call_operand.vmem [shape: bf16[32,128], index: 6, kind: input, shape index: {}]
  %s7 = inlined_call_operand.vmem [shape: f32[1,128], index: 7, kind: input, shape index: {}]
  %s8 = inlined_call_operand.vmem [shape: f32[1,32], index: 8, kind: input, shape index: {}]
  %s9 = inlined_call_operand.vmem [shape: f32[1,32], index: 9, kind: input, shape index: {}]
  %s10 = inlined_call_operand.vmem [shape: f32[1,32], index: 10, kind: input, shape index: {}]
  %s11 = inlined_call_operand.hbm [shape: bf16[32,64], index: 11, kind: input, shape index: {}]
  %s12 = inlined_call_operand.vmem [shape: f32[1,64], index: 12, kind: input, shape index: {}]
  %s13 = inlined_call_operand.vmem [shape: bf16[64,32], index: 13, kind: input, shape index: {}]
  %s14 = inlined_call_operand.vmem [shape: f32[1,32], index: 14, kind: input, shape index: {}]
  %s15 = inlined_call_operand.hbm [shape: f32[16,32], index: 15, kind: output, shape index: {}]
  %s16 = sld [smem:[#allocation0]]
  $region101: #{tpu_custom_call.1} parent=0
    _
  %s18 = ssub.s32 1, %s16
  %s19 = scalar_select 0, %s18, %s16
  $region1: #{tpu_custom_call.1} parent=0
    #allocation2 [shape = 'u8[4096]{0}', space=vmem, size = 0x1000, scoped, tag = 'input window, operand 1, single buffered']
    #allocation3 [shape = 's32[2]{0}', space=sflag, size = 0x8, scoped, tag = 'scoped memory for tpu_custom_call.1']
    #allocation4 [shape = 's32[2]{0}', space=sflag, size = 0x8, scoped, tag = 'scoped memory for tpu_custom_call.1']
    #allocation5 [shape = 'u8[8192]{0}', space=vmem, size = 0x2000, scoped, tag = 'input window, operand 11, single buffered']
    #allocation6 [shape = 's32[1]{0}', space=sflag, size = 0x4, scoped, tag = 'scoped memory for tpu_custom_call.1']
    #allocation7 [shape = 'u8[8192]{0}', space=vmem, size = 0x2000, scoped, tag = 'output window, operand 0']
    %20 = vsyncpa [#allocation3], 0
    %21 = vsyncpa [#allocation6], 0
    %22 = vsyncpa [#allocation4], 0
    %s23 = scalar_lea.sflag [#allocation4], 1
    %24 = vsyncpa %s23, 0
    loop: start=0, step=1, limit=4
    $region2: #{tpu_custom_call.1} parent=1 // loop_pre_header
      _
    $region3: #{tpu_custom_call.1} parent=1 // loop_header
      %s26 = sphi 0, %s30
      %p27 = scmp.ge.s32.totalorder %s26, 4
      %s36 = sphi 0, %s38
      %s39 = sphi 0, %s36
      %s40 = sphi 0, %s39
      %s56 = sphi 0, %s40
      %s60 = sphi 0, %s60
      %s62 = sphi 0, %s60
      %s63 = sphi 0, %s62
      %s77 = sphi 0, %s63
      %s81 = sphi 0, %s81
      %s83 = sphi 0, %s81
      %s84 = sphi 0, %s83
      %s98 = sphi 0, %s84
      %s102 = sphi 0, %s102
      %s104 = sphi 0, %s102
      %s105 = sphi 0, %s104
      %s119 = sphi 0, %s105
      %s123 = sphi 0, %s123
      %s125 = sphi 0, %s123
      %s126 = sphi 0, %s125
      %s140 = sphi 0, %s126
      %s144 = sphi 0, %s144
      %s146 = sphi 0, %s144
      %s147 = sphi 0, %s146
      %s161 = sphi 0, %s147
      %s165 = sphi 0, %s165
      %s167 = sphi 0, %s165
      %s168 = sphi 0, %s167
      %s182 = sphi 0, %s168
      %s186 = sphi 0, %s186
      %s188 = sphi 0, %s186
      %s189 = sphi 0, %s188
      %s203 = sphi 0, %s189
      %s207 = sphi 0, %s207
      %s209 = sphi 0, %s207
      %s210 = sphi 0, %s209
      %s224 = sphi 0, %s210
      %s228 = sphi 0, %s228
      %s230 = sphi 0, %s228
      %s231 = sphi 0, %s230
      %s245 = sphi 0, %s231
      %s249 = sphi 0, %s249
      %s251 = sphi 0, %s249
      %s252 = sphi 0, %s251
      %s266 = sphi 0, %s252
      %s270 = sphi 0, %s270
      %s272 = sphi 0, %s270
      %s273 = sphi 0, %s272
      %s287 = sphi 0, %s273
      %s291 = sphi 0, %s291
      %s293 = sphi 0, %s291
      %s294 = sphi 0, %s293
      %s308 = sphi 0, %s294
      %s312 = sphi 0, %s312
      %s314 = sphi 0, %s312
      %s315 = sphi 0, %s314
      %s329 = sphi 0, %s315
      %s333 = sphi 0, %s333
      %s335 = sphi 0, %s333
      %s336 = sphi 0, %s335
      %s350 = sphi 0, %s336
      %s356 = sphi 0, %s358
      %s359 = sphi 0, %s356
      %s360 = sphi 0, %s359
      %s376 = sphi 0, %s360
    $region4: #{tpu_custom_call.1} parent=1 // loop_header_branch
      %29 = sbr.rel (%p27) target = $region8
    $region5: #{tpu_custom_call.1} parent=1 // loop_body
      %s31 = ssub.s32 %s26, 1
      %s32 = ssub.s32 %s26, 2
      %s33 = sadd.s32 %s26, 1
      %s34 = ssub.s32 %s26, %s33
      %p35 = scmp.eq.s32.totalorder %s34, 0
      %s37 = sadd.s32 %s36, 1
      %s38 = scalar_select %p35, %s36, %s37
      %p41 = pneg %p35
      %p42 = scmp.eq.s32.totalorder %s26, 1
      %p43 = por %p41, %p42
      %p44 = scmp.ne.s32.totalorder %s36, %s39
      %p45 = scmp.eq.s32.totalorder %s26, 0
      %p46 = por %p44, %p45
      %p47 = scmp.ne.s32.totalorder %s36, %s39
      %p48 = scmp.eq.s32.totalorder %s31, 1
      %p49 = por %p47, %p48
      %p50 = scmp.ne.s32.totalorder %s39, %s40
      %p51 = scmp.eq.s32.totalorder %s31, 0
      %p52 = por %p50, %p51
      %p53 = scmp.ne.s32.totalorder %s39, %s40
      %p54 = scmp.eq.s32.totalorder %s32, 1
      %p55 = por %p53, %p54
      %p57 = scmp.ne.s32.totalorder %s40, %s56
      %p58 = scmp.eq.s32.totalorder %s32, 0
      %p59 = por %p57, %p58
      %s61 = sadd.s32 %s60, 1
      %p64 = scmp.eq.s32.totalorder %s26, 1
      %p65 = scmp.ne.s32.totalorder %s60, %s62
      %p66 = scmp.eq.s32.totalorder %s26, 0
      %p67 = por %p65, %p66
      %p68 = scmp.ne.s32.totalorder %s60, %s62
      %p69 = scmp.eq.s32.totalorder %s31, 1
      %p70 = por %p68, %p69
      %p71 = scmp.ne.s32.totalorder %s62, %s63
      %p72 = scmp.eq.s32.totalorder %s31, 0
      %p73 = por %p71, %p72
      %p74 = scmp.ne.s32.totalorder %s62, %s63
      %p75 = scmp.eq.s32.totalorder %s32, 1
      %p76 = por %p74, %p75
      %p78 = scmp.ne.s32.totalorder %s63, %s77
      %p79 = scmp.eq.s32.totalorder %s32, 0
      %p80 = por %p78, %p79
      %s82 = sadd.s32 %s81, 1
      %p85 = scmp.eq.s32.totalorder %s26, 1
      %p86 = scmp.ne.s32.totalorder %s81, %s83
      %p87 = scmp.eq.s32.totalorder %s26, 0
      %p88 = por %p86, %p87
      %p89 = scmp.ne.s32.totalorder %s81, %s83
      %p90 = scmp.eq.s32.totalorder %s31, 1
      %p91 = por %p89, %p90
      %p92 = scmp.ne.s32.totalorder %s83, %s84
      %p93 = scmp.eq.s32.totalorder %s31, 0
      %p94 = por %p92, %p93
      %p95 = scmp.ne.s32.totalorder %s83, %s84
      %p96 = scmp.eq.s32.totalorder %s32, 1
      %p97 = por %p95, %p96
      %p99 = scmp.ne.s32.totalorder %s84, %s98
      %p100 = scmp.eq.s32.totalorder %s32, 0
      %p101 = por %p99, %p100
      %s103 = sadd.s32 %s102, 1
      %p106 = scmp.eq.s32.totalorder %s26, 1
      %p107 = scmp.ne.s32.totalorder %s102, %s104
      %p108 = scmp.eq.s32.totalorder %s26, 0
      %p109 = por %p107, %p108
      %p110 = scmp.ne.s32.totalorder %s102, %s104
      %p111 = scmp.eq.s32.totalorder %s31, 1
      %p112 = por %p110, %p111
      %p113 = scmp.ne.s32.totalorder %s104, %s105
      %p114 = scmp.eq.s32.totalorder %s31, 0
      %p115 = por %p113, %p114
      %p116 = scmp.ne.s32.totalorder %s104, %s105
      %p117 = scmp.eq.s32.totalorder %s32, 1
      %p118 = por %p116, %p117
      %p120 = scmp.ne.s32.totalorder %s105, %s119
      %p121 = scmp.eq.s32.totalorder %s32, 0
      %p122 = por %p120, %p121
      %s124 = sadd.s32 %s123, 1
      %p127 = scmp.eq.s32.totalorder %s26, 1
      %p128 = scmp.ne.s32.totalorder %s123, %s125
      %p129 = scmp.eq.s32.totalorder %s26, 0
      %p130 = por %p128, %p129
      %p131 = scmp.ne.s32.totalorder %s123, %s125
      %p132 = scmp.eq.s32.totalorder %s31, 1
      %p133 = por %p131, %p132
      %p134 = scmp.ne.s32.totalorder %s125, %s126
      %p135 = scmp.eq.s32.totalorder %s31, 0
      %p136 = por %p134, %p135
      %p137 = scmp.ne.s32.totalorder %s125, %s126
      %p138 = scmp.eq.s32.totalorder %s32, 1
      %p139 = por %p137, %p138
      %p141 = scmp.ne.s32.totalorder %s126, %s140
      %p142 = scmp.eq.s32.totalorder %s32, 0
      %p143 = por %p141, %p142
      %s145 = sadd.s32 %s144, 1
      %p148 = scmp.eq.s32.totalorder %s26, 1
      %p149 = scmp.ne.s32.totalorder %s144, %s146
      %p150 = scmp.eq.s32.totalorder %s26, 0
      %p151 = por %p149, %p150
      %p152 = scmp.ne.s32.totalorder %s144, %s146
      %p153 = scmp.eq.s32.totalorder %s31, 1
      %p154 = por %p152, %p153
      %p155 = scmp.ne.s32.totalorder %s146, %s147
      %p156 = scmp.eq.s32.totalorder %s31, 0
      %p157 = por %p155, %p156
      %p158 = scmp.ne.s32.totalorder %s146, %s147
      %p159 = scmp.eq.s32.totalorder %s32, 1
      %p160 = por %p158, %p159
      %p162 = scmp.ne.s32.totalorder %s147, %s161
      %p163 = scmp.eq.s32.totalorder %s32, 0
      %p164 = por %p162, %p163
      %s166 = sadd.s32 %s165, 1
      %p169 = scmp.eq.s32.totalorder %s26, 1
      %p170 = scmp.ne.s32.totalorder %s165, %s167
      %p171 = scmp.eq.s32.totalorder %s26, 0
      %p172 = por %p170, %p171
      %p173 = scmp.ne.s32.totalorder %s165, %s167
      %p174 = scmp.eq.s32.totalorder %s31, 1
      %p175 = por %p173, %p174
      %p176 = scmp.ne.s32.totalorder %s167, %s168
      %p177 = scmp.eq.s32.totalorder %s31, 0
      %p178 = por %p176, %p177
      %p179 = scmp.ne.s32.totalorder %s167, %s168
      %p180 = scmp.eq.s32.totalorder %s32, 1
      %p181 = por %p179, %p180
      %p183 = scmp.ne.s32.totalorder %s168, %s182
      %p184 = scmp.eq.s32.totalorder %s32, 0
      %p185 = por %p183, %p184
      %s187 = sadd.s32 %s186, 1
      %p190 = scmp.eq.s32.totalorder %s26, 1
      %p191 = scmp.ne.s32.totalorder %s186, %s188
      %p192 = scmp.eq.s32.totalorder %s26, 0
      %p193 = por %p191, %p192
      %p194 = scmp.ne.s32.totalorder %s186, %s188
      %p195 = scmp.eq.s32.totalorder %s31, 1
      %p196 = por %p194, %p195
      %p197 = scmp.ne.s32.totalorder %s188, %s189
      %p198 = scmp.eq.s32.totalorder %s31, 0
      %p199 = por %p197, %p198
      %p200 = scmp.ne.s32.totalorder %s188, %s189
      %p201 = scmp.eq.s32.totalorder %s32, 1
      %p202 = por %p200, %p201
      %p204 = scmp.ne.s32.totalorder %s189, %s203
      %p205 = scmp.eq.s32.totalorder %s32, 0
      %p206 = por %p204, %p205
      %s208 = sadd.s32 %s207, 1
      %p211 = scmp.eq.s32.totalorder %s26, 1
      %p212 = scmp.ne.s32.totalorder %s207, %s209
      %p213 = scmp.eq.s32.totalorder %s26, 0
      %p214 = por %p212, %p213
      %p215 = scmp.ne.s32.totalorder %s207, %s209
      %p216 = scmp.eq.s32.totalorder %s31, 1
      %p217 = por %p215, %p216
      %p218 = scmp.ne.s32.totalorder %s209, %s210
      %p219 = scmp.eq.s32.totalorder %s31, 0
      %p220 = por %p218, %p219
      %p221 = scmp.ne.s32.totalorder %s209, %s210
      %p222 = scmp.eq.s32.totalorder %s32, 1
      %p223 = por %p221, %p222
      %p225 = scmp.ne.s32.totalorder %s210, %s224
      %p226 = scmp.eq.s32.totalorder %s32, 0
      %p227 = por %p225, %p226
      %s229 = sadd.s32 %s228, 1
      %p232 = scmp.eq.s32.totalorder %s26, 1
      %p233 = scmp.ne.s32.totalorder %s228, %s230
      %p234 = scmp.eq.s32.totalorder %s26, 0
      %p235 = por %p233, %p234
      %p236 = scmp.ne.s32.totalorder %s228, %s230
      %p237 = scmp.eq.s32.totalorder %s31, 1
      %p238 = por %p236, %p237
      %p239 = scmp.ne.s32.totalorder %s230, %s231
      %p240 = scmp.eq.s32.totalorder %s31, 0
      %p241 = por %p239, %p240
      %p242 = scmp.ne.s32.totalorder %s230, %s231
      %p243 = scmp.eq.s32.totalorder %s32, 1
      %p244 = por %p242, %p243
      %p246 = scmp.ne.s32.totalorder %s231, %s245
      %p247 = scmp.eq.s32.totalorder %s32, 0
      %p248 = por %p246, %p247
      %s250 = sadd.s32 %s249, 1
      %p253 = scmp.eq.s32.totalorder %s26, 1
      %p254 = scmp.ne.s32.totalorder %s249, %s251
      %p255 = scmp.eq.s32.totalorder %s26, 0
      %p256 = por %p254, %p255
      %p257 = scmp.ne.s32.totalorder %s249, %s251
      %p258 = scmp.eq.s32.totalorder %s31, 1
      %p259 = por %p257, %p258
      %p260 = scmp.ne.s32.totalorder %s251, %s252
      %p261 = scmp.eq.s32.totalorder %s31, 0
      %p262 = por %p260, %p261
      %p263 = scmp.ne.s32.totalorder %s251, %s252
      %p264 = scmp.eq.s32.totalorder %s32, 1
      %p265 = por %p263, %p264
      %p267 = scmp.ne.s32.totalorder %s252, %s266
      %p268 = scmp.eq.s32.totalorder %s32, 0
      %p269 = por %p267, %p268
      %s271 = sadd.s32 %s270, 1
      %p274 = scmp.eq.s32.totalorder %s26, 1
      %p275 = scmp.ne.s32.totalorder %s270, %s272
      %p276 = scmp.eq.s32.totalorder %s26, 0
      %p277 = por %p275, %p276
      %p278 = scmp.ne.s32.totalorder %s270, %s272
      %p279 = scmp.eq.s32.totalorder %s31, 1
      %p280 = por %p278, %p279
      %p281 = scmp.ne.s32.totalorder %s272, %s273
      %p282 = scmp.eq.s32.totalorder %s31, 0
      %p283 = por %p281, %p282
      %p284 = scmp.ne.s32.totalorder %s272, %s273
      %p285 = scmp.eq.s32.totalorder %s32, 1
      %p286 = por %p284, %p285
      %p288 = scmp.ne.s32.totalorder %s273, %s287
      %p289 = scmp.eq.s32.totalorder %s32, 0
      %p290 = por %p288, %p289
      %s292 = sadd.s32 %s291, 1
      %p295 = scmp.eq.s32.totalorder %s26, 1
      %p296 = scmp.ne.s32.totalorder %s291, %s293
      %p297 = scmp.eq.s32.totalorder %s26, 0
      %p298 = por %p296, %p297
      %p299 = scmp.ne.s32.totalorder %s291, %s293
      %p300 = scmp.eq.s32.totalorder %s31, 1
      %p301 = por %p299, %p300
      %p302 = scmp.ne.s32.totalorder %s293, %s294
      %p303 = scmp.eq.s32.totalorder %s31, 0
      %p304 = por %p302, %p303
      %p305 = scmp.ne.s32.totalorder %s293, %s294
      %p306 = scmp.eq.s32.totalorder %s32, 1
      %p307 = por %p305, %p306
      %p309 = scmp.ne.s32.totalorder %s294, %s308
      %p310 = scmp.eq.s32.totalorder %s32, 0
      %p311 = por %p309, %p310
      %s313 = sadd.s32 %s312, 1
      %p316 = scmp.eq.s32.totalorder %s26, 1
      %p317 = scmp.ne.s32.totalorder %s312, %s314
      %p318 = scmp.eq.s32.totalorder %s26, 0
      %p319 = por %p317, %p318
      %p320 = scmp.ne.s32.totalorder %s312, %s314
      %p321 = scmp.eq.s32.totalorder %s31, 1
      %p322 = por %p320, %p321
      %p323 = scmp.ne.s32.totalorder %s314, %s315
      %p324 = scmp.eq.s32.totalorder %s31, 0
      %p325 = por %p323, %p324
      %p326 = scmp.ne.s32.totalorder %s314, %s315
      %p327 = scmp.eq.s32.totalorder %s32, 1
      %p328 = por %p326, %p327
      %p330 = scmp.ne.s32.totalorder %s315, %s329
      %p331 = scmp.eq.s32.totalorder %s32, 0
      %p332 = por %p330, %p331
      %s334 = sadd.s32 %s333, 1
      %p337 = scmp.eq.s32.totalorder %s26, 1
      %p338 = scmp.ne.s32.totalorder %s333, %s335
      %p339 = scmp.eq.s32.totalorder %s26, 0
      %p340 = por %p338, %p339
      %p341 = scmp.ne.s32.totalorder %s333, %s335
      %p342 = scmp.eq.s32.totalorder %s31, 1
      %p343 = por %p341, %p342
      %p344 = scmp.ne.s32.totalorder %s335, %s336
      %p345 = scmp.eq.s32.totalorder %s31, 0
      %p346 = por %p344, %p345
      %p347 = scmp.ne.s32.totalorder %s335, %s336
      %p348 = scmp.eq.s32.totalorder %s32, 1
      %p349 = por %p347, %p348
      %p351 = scmp.ne.s32.totalorder %s336, %s350
      %p352 = scmp.eq.s32.totalorder %s32, 0
      %p353 = por %p351, %p352
      %s354 = ssub.s32 %s26, %s33
      %p355 = scmp.eq.s32.totalorder %s354, 0
      %s357 = sadd.s32 %s356, 1
      %s358 = scalar_select %p355, %s356, %s357
      %p361 = pneg %p355
      %p362 = scmp.eq.s32.totalorder %s26, 1
      %p363 = por %p361, %p362
      %p364 = scmp.ne.s32.totalorder %s356, %s359
      %p365 = scmp.eq.s32.totalorder %s26, 0
      %p366 = por %p364, %p365
      %p367 = scmp.ne.s32.totalorder %s356, %s359
      %p368 = scmp.eq.s32.totalorder %s31, 1
      %p369 = por %p367, %p368
      %p370 = scmp.ne.s32.totalorder %s359, %s360
      %p371 = scmp.eq.s32.totalorder %s31, 0
      %p372 = por %p370, %p371
      %p373 = scmp.ne.s32.totalorder %s359, %s360
      %p374 = scmp.eq.s32.totalorder %s32, 1
      %p375 = por %p373, %p374
      %p377 = scmp.ne.s32.totalorder %s360, %s376
      %p378 = scmp.eq.s32.totalorder %s32, 0
      %p379 = por %p377, %p378
      %p380 = scmp.le.s32.totalorder 1, %s26
      %p381 = scmp.lt.s32.totalorder %s26, 3
      %p382 = pnand %p380, %p381
      %p383 = pneg %p382
      // Predicated region
      $region9: #{tpu_custom_call.1} parent=5 // pred_check
        _
      $region10: #{tpu_custom_call.1} parent=5 // pred_check_branch
        %385 = sbr.rel (%p382) target = $region12
      $region11: #{tpu_custom_call.1} parent=5 // pred_region
        %s386 = ssub.s32 %s26, 1
        // Predicated region
        $region13: #{tpu_custom_call.1} parent=11 // pred_check
          %p387 = pneg %p73
        $region14: #{tpu_custom_call.1} parent=11 // pred_check_branch
          %389 = sbr.rel (%p387) target = $region16
        $region15: #{tpu_custom_call.1} parent=11 // pred_region
          %391 = vsyncadd [#allocation3], 0
          %s393 = sshll.u32 %s1, 4
          %s394 = int_to_ptr.hbm [resolvable:$true] %s393
          %s395 = sshll.u32 [#allocation2], 4
          %s396 = int_to_ptr.vmem [resolvable:$true] %s395
          %398 = dma.hbm_to_vmem [thread:$0]  %s394, 128, %s396, [#allocation3]
        $region16: #{tpu_custom_call.1} parent=11 // pred_fallthru
          _
        // Predicated region
        $region17: #{tpu_custom_call.1} parent=11 // pred_check
          %p399 = pneg %p94
        $region18: #{tpu_custom_call.1} parent=11 // pred_check_branch
          %401 = sbr.rel (%p399) target = $region20
        $region19: #{tpu_custom_call.1} parent=11 // pred_region
          _
        $region20: #{tpu_custom_call.1} parent=11 // pred_fallthru
          _
        // Predicated region
        $region21: #{tpu_custom_call.1} parent=11 // pred_check
          %p402 = pneg %p115
        $region22: #{tpu_custom_call.1} parent=11 // pred_check_branch
          %404 = sbr.rel (%p402) target = $region24
        $region23: #{tpu_custom_call.1} parent=11 // pred_region
          _
        $region24: #{tpu_custom_call.1} parent=11 // pred_fallthru
          _
        // Predicated region
        $region25: #{tpu_custom_call.1} parent=11 // pred_check
          %p405 = pneg %p136
        $region26: #{tpu_custom_call.1} parent=11 // pred_check_branch
          %407 = sbr.rel (%p405) target = $region28
        $region27: #{tpu_custom_call.1} parent=11 // pred_region
          _
        $region28: #{tpu_custom_call.1} parent=11 // pred_fallthru
          _
        // Predicated region
        $region29: #{tpu_custom_call.1} parent=11 // pred_check
          %p408 = pneg %p157
        $region30: #{tpu_custom_call.1} parent=11 // pred_check_branch
          %410 = sbr.rel (%p408) target = $region32
        $region31: #{tpu_custom_call.1} parent=11 // pred_region
          _
        $region32: #{tpu_custom_call.1} parent=11 // pred_fallthru
          _
        // Predicated region
        $region33: #{tpu_custom_call.1} parent=11 // pred_check
          %p411 = pneg %p178
        $region34: #{tpu_custom_call.1} parent=11 // pred_check_branch
          %413 = sbr.rel (%p411) target = $region36
        $region35: #{tpu_custom_call.1} parent=11 // pred_region
          _
        $region36: #{tpu_custom_call.1} parent=11 // pred_fallthru
          _
        // Predicated region
        $region37: #{tpu_custom_call.1} parent=11 // pred_check
          %p414 = pneg %p199
        $region38: #{tpu_custom_call.1} parent=11 // pred_check_branch
          %416 = sbr.rel (%p414) target = $region40
        $region39: #{tpu_custom_call.1} parent=11 // pred_region
          _
        $region40: #{tpu_custom_call.1} parent=11 // pred_fallthru
          _
        // Predicated region
        $region41: #{tpu_custom_call.1} parent=11 // pred_check
          %p417 = pneg %p220
        $region42: #{tpu_custom_call.1} parent=11 // pred_check_branch
          %419 = sbr.rel (%p417) target = $region44
        $region43: #{tpu_custom_call.1} parent=11 // pred_region
          _
        $region44: #{tpu_custom_call.1} parent=11 // pred_fallthru
          _
        // Predicated region
        $region45: #{tpu_custom_call.1} parent=11 // pred_check
          %p420 = pneg %p241
        $region46: #{tpu_custom_call.1} parent=11 // pred_check_branch
          %422 = sbr.rel (%p420) target = $region48
        $region47: #{tpu_custom_call.1} parent=11 // pred_region
          _
        $region48: #{tpu_custom_call.1} parent=11 // pred_fallthru
          _
        // Predicated region
        $region49: #{tpu_custom_call.1} parent=11 // pred_check
          %p423 = pneg %p262
        $region50: #{tpu_custom_call.1} parent=11 // pred_check_branch
          %425 = sbr.rel (%p423) target = $region52
        $region51: #{tpu_custom_call.1} parent=11 // pred_region
          _
        $region52: #{tpu_custom_call.1} parent=11 // pred_fallthru
          _
        // Predicated region
        $region53: #{tpu_custom_call.1} parent=11 // pred_check
          %p426 = pneg %p283
        $region54: #{tpu_custom_call.1} parent=11 // pred_check_branch
          %428 = sbr.rel (%p426) target = $region56
        $region55: #{tpu_custom_call.1} parent=11 // pred_region
          %430 = vsyncadd [#allocation6], 0
          %s431 = sshll.u32 %s11, 4
          %s432 = int_to_ptr.hbm [resolvable:$true] %s431
          %s433 = sshll.u32 [#allocation5], 4
          %s434 = int_to_ptr.vmem [resolvable:$true] %s433
          %439 = dma.hbm_to_vmem [thread:$0]  %s432, 256, %s434, [#allocation6], 64, 64, 4
        $region56: #{tpu_custom_call.1} parent=11 // pred_fallthru
          _
        // Predicated region
        $region57: #{tpu_custom_call.1} parent=11 // pred_check
          %p440 = pneg %p304
        $region58: #{tpu_custom_call.1} parent=11 // pred_check_branch
          %442 = sbr.rel (%p440) target = $region60
        $region59: #{tpu_custom_call.1} parent=11 // pred_region
          _
        $region60: #{tpu_custom_call.1} parent=11 // pred_fallthru
          _
        // Predicated region
        $region61: #{tpu_custom_call.1} parent=11 // pred_check
          %p443 = pneg %p325
        $region62: #{tpu_custom_call.1} parent=11 // pred_check_branch
          %445 = sbr.rel (%p443) target = $region64
        $region63: #{tpu_custom_call.1} parent=11 // pred_region
          _
        $region64: #{tpu_custom_call.1} parent=11 // pred_fallthru
          _
        // Predicated region
        $region65: #{tpu_custom_call.1} parent=11 // pred_check
          %p446 = pneg %p346
        $region66: #{tpu_custom_call.1} parent=11 // pred_check_branch
          %448 = sbr.rel (%p446) target = $region68
        $region67: #{tpu_custom_call.1} parent=11 // pred_region
          _
        $region68: #{tpu_custom_call.1} parent=11 // pred_fallthru
          _
      $region12: #{tpu_custom_call.1} parent=5 // pred_fallthru
        _
      %p449 = scmp.lt.s32.totalorder %s26, 2
      // Predicated region
      $region69: #{tpu_custom_call.1} parent=5 // pred_check
        %p450 = pneg %p449
      $region70: #{tpu_custom_call.1} parent=5 // pred_check_branch
        %452 = sbr.rel (%p450) target = $region72
      $region71: #{tpu_custom_call.1} parent=5 // pred_region
        // Predicated region
        $region73: #{tpu_custom_call.1} parent=71 // pred_check
          %p453 = pneg %p46
        $region74: #{tpu_custom_call.1} parent=71 // pred_check_branch
          %455 = sbr.rel (%p453) target = $region76
        $region75: #{tpu_custom_call.1} parent=71 // pred_region
          %p456 = scmp.lt.s32.totalorder %s26, 1
          %s457 = scalar_select %p456, %s26, 1
          %s458 = smul.addr %s457, 8
          %s459 = scalar_lea.vmem %s0, %s458
        $region76: #{tpu_custom_call.1} parent=71 // pred_fallthru
          _
      $region72: #{tpu_custom_call.1} parent=5 // pred_fallthru
        _
      %p460 = scmp.le.s32.totalorder 1, %s26
      %p461 = scmp.lt.s32.totalorder %s26, 3
      %p462 = pnand %p460, %p461
      %p463 = pneg %p462
      // Predicated region
      $region77: #{tpu_custom_call.1} parent=5 // pred_check
        _
      $region78: #{tpu_custom_call.1} parent=5 // pred_check_branch
        %465 = sbr.rel (%p462) target = $region80
      $region79: #{tpu_custom_call.1} parent=5 // pred_region
        %s466 = ssub.s32 %s26, 1
        // Predicated region
        $region81: #{tpu_custom_call.1} parent=79 // pred_check
          %p467 = pneg %p73
        $region82: #{tpu_custom_call.1} parent=79 // pred_check_branch
          %469 = sbr.rel (%p467) target = $region84
        $region83: #{tpu_custom_call.1} parent=79 // pred_region
          %471 = dma.done [#allocation3], 128
        $region84: #{tpu_custom_call.1} parent=79 // pred_fallthru
          _
        // Predicated region
        $region85: #{tpu_custom_call.1} parent=79 // pred_check
          %p472 = pneg %p283
        $region86: #{tpu_custom_call.1} parent=79 // pred_check_branch
          %474 = sbr.rel (%p472) target = $region88
        $region87: #{tpu_custom_call.1} parent=79 // pred_region
          %476 = dma.done [#allocation6], 256
        $region88: #{tpu_custom_call.1} parent=79 // pred_fallthru
          _
        %p477 = scmp.lt.s32.totalorder %s31, 1
        %s478 = scalar_select %p477, %s31, 1
        %s479 = smul.addr %s478, 8
        %s480 = scalar_lea.vmem %s0, %s479
        %p481 = pneg %p52
        %p482 = pneg %p49
        %p483 = pneg %p73
        %p484 = pneg %p70
        %p485 = pneg %p94
        %p486 = pneg %p91
        %p487 = pneg %p115
        %p488 = pneg %p112
        %p489 = pneg %p136
        %p490 = pneg %p133
        %p491 = pneg %p157
        %p492 = pneg %p154
        %p493 = pneg %p178
        %p494 = pneg %p175
        %p495 = pneg %p199
        %p496 = pneg %p196
        %p497 = pneg %p220
        %p498 = pneg %p217
        %p499 = pneg %p241
        %p500 = pneg %p238
        %p501 = pneg %p262
        %p502 = pneg %p259
        %p503 = pneg %p283
        %p504 = pneg %p280
        %p505 = pneg %p304
        %p506 = pneg %p301
        %p507 = pneg %p325
        %p508 = pneg %p322
        %p509 = pneg %p346
        %p510 = pneg %p343
        %p511 = pneg %p372
        %p512 = pneg %p369
        %s513 = sand.u32 %s359, 1
        %s514 = scalar_lea.sflag [#allocation4], %s513
        %s515 = sand.u32 %s359, 1
        %s516 = smul.addr %s515, 8
        %s517 = scalar_lea.vmem [#allocation7], %s516
        %p518 = scmp.lt.s32.totalorder %s31, 1
        %s519 = scalar_select %p518, %s31, 1
        %s520 = smul.addr %s519, 8
        %s521 = scalar_lea.vmem %s0, %s520
        %v523 = vld [vmem:[%s521] sm:$0xff]
        %v524 = vld [vmem:[#allocation2] sm:$0xff]
        %v525 = vld [vmem:[%s2] sm:$0x1]
        %v526 = vld [vmem:[%s3] sm:$0x1]
        %vm527 = vcmask 261120
        %v528 = vsel %vm527, %v523, 0.0
        %529 = vadd.xlane.f32.xlu0 %v528
        %v530 = vpop.xlane.xlu0 %529
        %v531 = vrcp.pop 32.0
        %v532 = vmul.f32 32.0, %v531
        %v533 = vsub.f32 1.0, %v532
        %v534 = vmul.f32 %v531, %v533
        %v535 = vadd.f32 %v531, %v534
        %vm536 = vweird.f32 %v531
        %v537 = vsel %vm536, %v531, %v535
        %v538 = vmul.f32 %v530, %v537
        %v539 = vmul.f32 %v523, %v523
        %v540 = vsel %vm527, %v539, 0.0
        %541 = vadd.xlane.f32.xlu0 %v540
        %v542 = vpop.xlane.xlu0 %541
        %v543 = vmul.f32 %v542, %v537
        %v544 = vmul.f32 %v538, %v538
        %v545 = vsub.f32 %v543, %v544
        %v546 = vsub.f32 %v523, %v538
        %v547 = vadd.f32 %v545, 1e-05
        %v548 = vrsqrt.pop %v547
        %v549 = vmul.f32 %v548, %v547
        %v550 = vmul.f32 %v549, %v548
        %v551 = vmul.f32 0.5, %v550
        %v552 = vsub.f32 1.5, %v551
        %v553 = vmul.f32 %v548, %v552
        %vm554 = vweird.f32 %v547
        %vm555 = vweird.f32 %v548
        %vm556 = vmor %vm554, %vm555
        %v557 = vsel %vm556, %v548, %v553
        %v558 = vmul.f32 %v546, %v557
        %v560 = vperm.slane %v525, 0
        %v562 = vmul.f32 %v558, %v560
        %v564 = vperm.slane %v526, 0
        %v566 = vadd.f32 %v562, %v564
        %v567 = vpack.c.bf16 %v566, %v566
        %v568 = vld [vmem:[%s4] sm:$0xf]
        %v569 = vld [vmem:[%s4 + $0x4] sm:$0xf]
        %v570 = vld [vmem:[%s4 + $0x8] sm:$0xf]
        %v571 = vld [vmem:[%s4 + $0xc] sm:$0xf]
        %v572 = vld [vmem:[%s5] sm:$0x1]
        %v574 = vperm.slane %v572, 0
        %v580 = vunpack.c.l.b16 %v568
        %v581 = vunpack.c.l.b16 %v569
        %v582 = vunpack.c.l.b16 %v570
        %v583 = vunpack.c.l.b16 %v571
        %v584 = vpack.c.b16 %v581, %v580
        %v585 = vpack.c.b16 %v583, %v582
        %v589 = vsel %vm527, %v567, 0
        %591 = vmatpush.bf16.msra.mxu0 0
        %592 = vmatpush.bf16.msra.mxu0 0
        %593 = vmatpush.bf16.msra.mxu0 0
        %594 = vmatpush.bf16.msra.mxu0 0
        %595 = vmatpush.bf16.msra.mxu0 0
        %596 = vmatpush.bf16.msra.mxu0 0
        %597 = vmatpush.bf16.msra.mxu0 %v585
        %598 = vmatpush.bf16.msra.mxu0 %v584
        %599 = vmatmul.bf16.gmra.mxu0 %v589
        %v600 = vpop.f32.mrf.mxu0
        %v601 = vadd.f32 %v574, %v600
        %v602 = vpop.f32.mrf.mxu0
        %603 = vdwg.mxu0
        %v604 = vld [vmem:[%s6] sm:$0xf]
        %v605 = vld [vmem:[%s6 + $0x4] sm:$0xf]
        %v606 = vld [vmem:[%s6 + $0x8] sm:$0xf]
        %v607 = vld [vmem:[%s6 + $0xc] sm:$0xf]
        %v608 = vld [vmem:[%s7] sm:$0x1]
        %v610 = vperm.slane %v608, 0
        %v616 = vunpack.c.l.b16 %v604
        %v617 = vunpack.c.l.b16 %v605
        %v618 = vunpack.c.l.b16 %v606
        %v619 = vunpack.c.l.b16 %v607
        %v620 = vpack.c.b16 %v617, %v616
        %v621 = vpack.c.b16 %v619, %v618
        %624 = vmatpush.bf16.msra.mxu0 0
        %625 = vmatpush.bf16.msra.mxu0 0
        %626 = vmatpush.bf16.msra.mxu0 0
        %627 = vmatpush.bf16.msra.mxu0 0
        %628 = vmatpush.bf16.msra.mxu0 0
        %629 = vmatpush.bf16.msra.mxu0 0
        %630 = vmatpush.bf16.msra.mxu0 %v621
        %631 = vmatpush.bf16.msra.mxu0 %v620
        %632 = vmatmul.bf16.gmra.mxu0 %v589
        %v633 = vpop.f32.mrf.mxu0
        %v634 = vadd.f32 %v610, %v633
        %v635 = vpop.f32.mrf.mxu0
        %636 = vdwg.mxu0
        %638 = vrot.lane.b32.xlu0 %v601, 120
        %v639 = vpop.permute.xlu0 %638
        %641 = vrot.lane.b32.xlu0 %v601, 112
        %v642 = vpop.permute.xlu0 %641
        %644 = vrot.lane.b32.xlu0 %v601, 104
        %v645 = vpop.permute.xlu0 %644
        %648 = vrot.lane.b32.xlu0 %v634, 96
        %v649 = vpop.permute.xlu0 %648
        %651 = vrot.lane.b32.xlu0 %v634, 64
        %v652 = vpop.permute.xlu0 %651
        %654 = vrot.lane.b32.xlu0 %v634, 32
        %v655 = vpop.permute.xlu0 %654
        %v657 = vpack.c.bf16 %v601, %v601
        %v658 = vpack.c.bf16 %v639, %v639
        %v659 = vpack.c.bf16 %v642, %v642
        %v660 = vpack.c.bf16 %v645, %v645
        %v662 = vunpack.c.l.b16 %v657
        %v663 = vpack.c.b16 %v662, %v662
        %664 = vrot.lane.b32.xlu0 %v663, 96
        %v665 = vpop.permute.xlu0 %664
        %vm666 = vcmask 64512
        %v668 = vsel %vm666, %v657, 0
        %v671 = vsel %vm666, %v665, 0
        %673 = vmatpush.bf16.xpose.msra.mxu0 0
        %674 = vmatpush.bf16.xpose.msra.mxu0 0
        %675 = vmatpush.bf16.xpose.msra.mxu0 0
        %676 = vmatpush.bf16.xpose.msra.mxu0 0
        %677 = vmatpush.bf16.xpose.msra.mxu0 0
        %678 = vmatpush.bf16.xpose.msra.mxu0 0
        %679 = vmatpush.bf16.xpose.msra.mxu0 0
        %680 = vmatpush.bf16.xpose.msra.mxu0 %v671
        %681 = vmatmul.bf16.gmra.mxu0 %v668
        %v682 = vpop.f32.mrf.mxu0
        %v683 = vadd.f32 0.0, %v682
        %v684 = vpop.f32.mrf.mxu0
        %685 = vdwg.mxu0
        %v687 = vunpack.c.l.b16 %v658
        %v688 = vpack.c.b16 %v687, %v687
        %689 = vrot.lane.b32.xlu0 %v688, 96
        %v690 = vpop.permute.xlu0 %689
        %v692 = vsel %vm666, %v658, 0
        %v695 = vsel %vm666, %v690, 0
        %697 = vmatpush.bf16.xpose.msra.mxu0 0
        %698 = vmatpush.bf16.xpose.msra.mxu0 0
        %699 = vmatpush.bf16.xpose.msra.mxu0 0
        %700 = vmatpush.bf16.xpose.msra.mxu0 0
        %701 = vmatpush.bf16.xpose.msra.mxu0 0
        %702 = vmatpush.bf16.xpose.msra.mxu0 0
        %703 = vmatpush.bf16.xpose.msra.mxu0 0
        %704 = vmatpush.bf16.xpose.msra.mxu0 %v695
        %705 = vmatmul.bf16.gmra.mxu0 %v692
        %v706 = vpop.f32.mrf.mxu0
        %v707 = vadd.f32 0.0, %v706
        %v708 = vpop.f32.mrf.mxu0
        %709 = vdwg.mxu0
        %v711 = vunpack.c.l.b16 %v659
        %v712 = vpack.c.b16 %v711, %v711
        %713 = vrot.lane.b32.xlu0 %v712, 96
        %v714 = vpop.permute.xlu0 %713
        %v716 = vsel %vm666, %v659, 0
        %v719 = vsel %vm666, %v714, 0
        %721 = vmatpush.bf16.xpose.msra.mxu0 0
        %722 = vmatpush.bf16.xpose.msra.mxu0 0
        %723 = vmatpush.bf16.xpose.msra.mxu0 0
        %724 = vmatpush.bf16.xpose.msra.mxu0 0
        %725 = vmatpush.bf16.xpose.msra.mxu0 0
        %726 = vmatpush.bf16.xpose.msra.mxu0 0
        %727 = vmatpush.bf16.xpose.msra.mxu0 0
        %728 = vmatpush.bf16.xpose.msra.mxu0 %v719
        %729 = vmatmul.bf16.gmra.mxu0 %v716
        %v730 = vpop.f32.mrf.mxu0
        %v731 = vadd.f32 0.0, %v730
        %v732 = vpop.f32.mrf.mxu0
        %733 = vdwg.mxu0
        %v735 = vunpack.c.l.b16 %v660
        %v736 = vpack.c.b16 %v735, %v735
        %737 = vrot.lane.b32.xlu0 %v736, 96
        %v738 = vpop.permute.xlu0 %737
        %v740 = vsel %vm666, %v660, 0
        %v743 = vsel %vm666, %v738, 0
        %745 = vmatpush.bf16.xpose.msra.mxu0 0
        %746 = vmatpush.bf16.xpose.msra.mxu0 0
        %747 = vmatpush.bf16.xpose.msra.mxu0 0
        %748 = vmatpush.bf16.xpose.msra.mxu0 0
        %749 = vmatpush.bf16.xpose.msra.mxu0 0
        %750 = vmatpush.bf16.xpose.msra.mxu0 0
        %751 = vmatpush.bf16.xpose.msra.mxu0 0
        %752 = vmatpush.bf16.xpose.msra.mxu0 %v743
        %753 = vmatmul.bf16.gmra.mxu0 %v740
        %v754 = vpop.f32.mrf.mxu0
        %v755 = vadd.f32 0.0, %v754
        %v756 = vpop.f32.mrf.mxu0
        %757 = vdwg.mxu0
        %v758 = vmul.f32 %v683, 0.35355338
        %v759 = vmul.f32 %v707, 0.35355338
        %v760 = vmul.f32 %v731, 0.35355338
        %v761 = vmul.f32 %v755, 0.35355338
        %v762 = vadd.f32 %v758, %v524
        %v763 = vadd.f32 %v759, %v524
        %v764 = vadd.f32 %v760, %v524
        %v765 = vadd.f32 %v761, %v524
        %v766 = vsel %vm666, %v762, -inf
        %767 = vmax.xlane.f32.xlu0 %v766
        %v768 = vpop.xlane.xlu0 %767
        %v769 = vsel %vm666, %v763, -inf
        %770 = vmax.xlane.f32.xlu0 %v769
        %v771 = vpop.xlane.xlu0 %770
        %v772 = vsel %vm666, %v764, -inf
        %773 = vmax.xlane.f32.xlu0 %v772
        %v774 = vpop.xlane.xlu0 %773
        %v775 = vsel %vm666, %v765, -inf
        %776 = vmax.xlane.f32.xlu0 %v775
        %v777 = vpop.xlane.xlu0 %776
        %v778 = vsub.f32 %v762, %v768
        %v779 = vsub.f32 %v763, %v771
        %v780 = vsub.f32 %v764, %v774
        %v781 = vsub.f32 %v765, %v777
        %v782 = vmul.f32 %v778, 1.442695
        %v783 = vpow.pop %v782
        %v784 = vmul.f32 %v779, 1.442695
        %v785 = vpow.pop %v784
        %v786 = vmul.f32 %v780, 1.442695
        %v787 = vpow.pop %v786
        %v788 = vmul.f32 %v781, 1.442695
        %v789 = vpow.pop %v788
        %v790 = vsel %vm666, %v783, 0.0
        %791 = vadd.xlane.f32.xlu0 %v790
        %v792 = vpop.xlane.xlu0 %791
        %v793 = vsel %vm666, %v785, 0.0
        %794 = vadd.xlane.f32.xlu0 %v793
        %v795 = vpop.xlane.xlu0 %794
        %v796 = vsel %vm666, %v787, 0.0
        %797 = vadd.xlane.f32.xlu0 %v796
        %v798 = vpop.xlane.xlu0 %797
        %v799 = vsel %vm666, %v789, 0.0
        %800 = vadd.xlane.f32.xlu0 %v799
        %v801 = vpop.xlane.xlu0 %800
        %v802 = vrcp.pop %v792
        %v803 = vrcp.pop %v795
        %v804 = vrcp.pop %v798
        %v805 = vrcp.pop %v801
        %v806 = vmul.f32 %v783, %v802
        %v807 = vmul.f32 %v785, %v803
        %v808 = vmul.f32 %v787, %v804
        %v809 = vmul.f32 %v789, %v805
        %v810 = vpack.c.bf16 %v806, %v806
        %v811 = vpack.c.bf16 %v807, %v807
        %v812 = vpack.c.bf16 %v808, %v808
        %v813 = vpack.c.bf16 %v809, %v809
        %v814 = vpack.c.bf16 %v634, %v634
        %v815 = vpack.c.bf16 %v649, %v649
        %v816 = vpack.c.bf16 %v652, %v652
        %v817 = vpack.c.bf16 %v655, %v655
        %v819 = vsel %vm666, %v810, 0
        %vm821 = vcmask 1043456
        %v823 = vsel %vm821, %v814, 0
        %825 = vmatpush.bf16.msra.mxu0 0
        %826 = vmatpush.bf16.msra.mxu0 0
        %827 = vmatpush.bf16.msra.mxu0 0
        %828 = vmatpush.bf16.msra.mxu0 0
        %829 = vmatpush.bf16.msra.mxu0 0
        %830 = vmatpush.bf16.msra.mxu0 0
        %831 = vmatpush.bf16.msra.mxu0 0
        %832 = vmatpush.bf16.msra.mxu0 %v823
        %833 = vmatmul.bf16.gmra.mxu0 %v819
        %v834 = vpop.f32.mrf.mxu0
        %v835 = vadd.f32 0.0, %v834
        %v836 = vpop.f32.mrf.mxu0
        %837 = vdwg.mxu0
        %v839 = vsel %vm666, %v811, 0
        %v842 = vsel %vm821, %v815, 0
        %844 = vmatpush.bf16.msra.mxu0 0
        %845 = vmatpush.bf16.msra.mxu0 0
        %846 = vmatpush.bf16.msra.mxu0 0
        %847 = vmatpush.bf16.msra.mxu0 0
        %848 = vmatpush.bf16.msra.mxu0 0
        %849 = vmatpush.bf16.msra.mxu0 0
        %850 = vmatpush.bf16.msra.mxu0 0
        %851 = vmatpush.bf16.msra.mxu0 %v842
        %852 = vmatmul.bf16.gmra.mxu0 %v839
        %v853 = vpop.f32.mrf.mxu0
        %v854 = vadd.f32 0.0, %v853
        %v855 = vpop.f32.mrf.mxu0
        %856 = vdwg.mxu0
        %v858 = vsel %vm666, %v812, 0
        %v861 = vsel %vm821, %v816, 0
        %863 = vmatpush.bf16.msra.mxu0 0
        %864 = vmatpush.bf16.msra.mxu0 0
        %865 = vmatpush.bf16.msra.mxu0 0
        %866 = vmatpush.bf16.msra.mxu0 0
        %867 = vmatpush.bf16.msra.mxu0 0
        %868 = vmatpush.bf16.msra.mxu0 0
        %869 = vmatpush.bf16.msra.mxu0 0
        %870 = vmatpush.bf16.msra.mxu0 %v861
        %871 = vmatmul.bf16.gmra.mxu0 %v858
        %v872 = vpop.f32.mrf.mxu0
        %v873 = vadd.f32 0.0, %v872
        %v874 = vpop.f32.mrf.mxu0
        %875 = vdwg.mxu0
        %v877 = vsel %vm666, %v813, 0
        %v880 = vsel %vm821, %v817, 0
        %882 = vmatpush.bf16.msra.mxu0 0
        %883 = vmatpush.bf16.msra.mxu0 0
        %884 = vmatpush.bf16.msra.mxu0 0
        %885 = vmatpush.bf16.msra.mxu0 0
        %886 = vmatpush.bf16.msra.mxu0 0
        %887 = vmatpush.bf16.msra.mxu0 0
        %888 = vmatpush.bf16.msra.mxu0 0
        %889 = vmatpush.bf16.msra.mxu0 %v880
        %890 = vmatmul.bf16.gmra.mxu0 %v877
        %v891 = vpop.f32.mrf.mxu0
        %v892 = vadd.f32 0.0, %v891
        %v893 = vpop.f32.mrf.mxu0
        %894 = vdwg.mxu0
        %v895 = vld [vmem:[%s8] sm:$0x1]
        %v897 = vperm.slane %v895, 0
        %v899 = vadd.f32 %v897, %v835
        %v900 = vadd.f32 %v899, %v854
        %v901 = vadd.f32 %v900, %v873
        %v902 = vadd.f32 %v901, %v892
        %v903 = vadd.f32 %v523, %v902
        %v904 = vld [vmem:[%s9] sm:$0x1]
        %v905 = vld [vmem:[%s10] sm:$0x1]
        %v906 = vsel %vm527, %v903, 0.0
        %907 = vadd.xlane.f32.xlu0 %v906
        %v908 = vpop.xlane.xlu0 %907
        %v909 = vmul.f32 %v908, %v537
        %v910 = vmul.f32 %v903, %v903
        %v911 = vsel %vm527, %v910, 0.0
        %912 = vadd.xlane.f32.xlu0 %v911
        %v913 = vpop.xlane.xlu0 %912
        %v914 = vmul.f32 %v913, %v537
        %v915 = vmul.f32 %v909, %v909
        %v916 = vsub.f32 %v914, %v915
        %v917 = vsub.f32 %v903, %v909
        %v918 = vadd.f32 %v916, 1e-05
        %v919 = vrsqrt.pop %v918
        %v920 = vmul.f32 %v919, %v918
        %v921 = vmul.f32 %v920, %v919
        %v922 = vmul.f32 0.5, %v921
        %v923 = vsub.f32 1.5, %v922
        %v924 = vmul.f32 %v919, %v923
        %vm925 = vweird.f32 %v918
        %vm926 = vweird.f32 %v919
        %vm927 = vmor %vm925, %vm926
        %v928 = vsel %vm927, %v919, %v924
        %v929 = vmul.f32 %v917, %v928
        %v931 = vperm.slane %v904, 0
        %v933 = vmul.f32 %v929, %v931
        %v935 = vperm.slane %v905, 0
        %v937 = vadd.f32 %v933, %v935
        %v938 = vpack.c.bf16 %v937, %v937
        %v939 = vld [vmem:[#allocation5] sm:$0xf]
        %v940 = vld [vmem:[#allocation5 + $0x4] sm:$0xf]
        %v941 = vld [vmem:[#allocation5 + $0x8] sm:$0xf]
        %v942 = vld [vmem:[#allocation5 + $0xc] sm:$0xf]
        %v943 = vld [vmem:[%s12] sm:$0x1]
        %v945 = vperm.slane %v943, 0
        %v951 = vunpack.c.l.b16 %v939
        %v952 = vunpack.c.l.b16 %v940
        %v953 = vunpack.c.l.b16 %v941
        %v954 = vunpack.c.l.b16 %v942
        %v955 = vpack.c.b16 %v952, %v951
        %v956 = vpack.c.b16 %v954, %v953
        %v960 = vsel %vm527, %v938, 0
        %962 = vmatpush.bf16.msra.mxu0 0
        %963 = vmatpush.bf16.msra.mxu0 0
        %964 = vmatpush.bf16.msra.mxu0 0
        %965 = vmatpush.bf16.msra.mxu0 0
        %966 = vmatpush.bf16.msra.mxu0 0
        %967 = vmatpush.bf16.msra.mxu0 0
        %968 = vmatpush.bf16.msra.mxu0 %v956
        %969 = vmatpush.bf16.msra.mxu0 %v955
        %970 = vmatmul.bf16.gmra.mxu0 %v960
        %v971 = vpop.f32.mrf.mxu0
        %v972 = vadd.f32 %v945, %v971
        %v973 = vpop.f32.mrf.mxu0
        %974 = vdwg.mxu0
        %v975 = vmax.f32 %v972, 0.0
        %v976 = vpack.c.bf16 %v975, %v975
        %v977 = vld [vmem:[%s13] sm:$0xf]
        %v978 = vld [vmem:[%s13 + $0x4] sm:$0xf]
        %v979 = vld [vmem:[%s13 + $0x8] sm:$0xf]
        %v980 = vld [vmem:[%s13 + $0xc] sm:$0xf]
        %v981 = vld [vmem:[%s13 + $0x10] sm:$0xf]
        %v982 = vld [vmem:[%s13 + $0x14] sm:$0xf]
        %v983 = vld [vmem:[%s13 + $0x18] sm:$0xf]
        %v984 = vld [vmem:[%s13 + $0x1c] sm:$0xf]
        %v985 = vld [vmem:[%s14] sm:$0x1]
        %v987 = vperm.slane %v985, 0
        %v997 = vunpack.c.l.b16 %v977
        %v998 = vunpack.c.l.b16 %v978
        %v999 = vunpack.c.l.b16 %v979
        %v1000 = vunpack.c.l.b16 %v980
        %v1001 = vunpack.c.l.b16 %v981
        %v1002 = vunpack.c.l.b16 %v982
        %v1003 = vunpack.c.l.b16 %v983
        %v1004 = vunpack.c.l.b16 %v984
        %v1005 = vpack.c.b16 %v998, %v997
        %v1006 = vpack.c.b16 %v1000, %v999
        %v1007 = vpack.c.b16 %v1002, %v1001
        %v1008 = vpack.c.b16 %v1004, %v1003
        %vm1013 = vcmask 523264
        %v1015 = vsel %vm1013, %v976, 0
        %1017 = vmatpush.bf16.msra.mxu0 0
        %1018 = vmatpush.bf16.msra.mxu0 0
        %1019 = vmatpush.bf16.msra.mxu0 0
        %1020 = vmatpush.bf16.msra.mxu0 0
        %1021 = vmatpush.bf16.msra.mxu0 %v1008
        %1022 = vmatpush.bf16.msra.mxu0 %v1007
        %1023 = vmatpush.bf16.msra.mxu0 %v1006
        %1024 = vmatpush.bf16.msra.mxu0 %v1005
        %1025 = vmatmul.bf16.gmra.mxu0 %v1015
        %v1026 = vpop.f32.mrf.mxu0
        %v1027 = vadd.f32 %v987, %v1026
        %v1028 = vpop.f32.mrf.mxu0
        %1029 = vdwg.mxu0
        %v1030 = vadd.f32 %v903, %v1027
        %1031 = vst.msk [vmem:[%s517] sm:$0xff] %vm527, %v1030
        %s1032 = sand.u32 %s359, 1
        %s1033 = scalar_lea.sflag [#allocation4], %s1032
        %s1034 = sand.u32 %s359, 1
        %s1035 = smul.addr %s1034, 8
        %s1036 = scalar_lea.vmem [#allocation7], %s1035
        // Predicated region
        $region89: #{tpu_custom_call.1} parent=79 // pred_check
          %p1037 = pneg %p369
        $region90: #{tpu_custom_call.1} parent=79 // pred_check_branch
          %1039 = sbr.rel (%p1037) target = $region92
        $region91: #{tpu_custom_call.1} parent=79 // pred_region
          %1041 = vsyncadd %s1033, 0
          %s1042 = smul.addr %s31, 8
          %s1043 = scalar_lea.hbm %s15, %s1042
          %s1045 = sshll.u32 %s1036, 4
          %s1046 = int_to_ptr.vmem [resolvable:$true] %s1045
          %s1047 = sshll.u32 %s1043, 4
          %s1048 = int_to_ptr.hbm [resolvable:$true] %s1047
          %1050 = dma.vmem_to_hbm [thread:$0]  %s1046, 128, %s1048, %s1033
        $region92: #{tpu_custom_call.1} parent=79 // pred_fallthru
          _
      $region80: #{tpu_custom_call.1} parent=5 // pred_fallthru
        _
      %p1051 = scmp.le.s32.totalorder 2, %s26
      // Predicated region
      $region93: #{tpu_custom_call.1} parent=5 // pred_check
        %p1052 = pneg %p1051
      $region94: #{tpu_custom_call.1} parent=5 // pred_check_branch
        %1054 = sbr.rel (%p1052) target = $region96
      $region95: #{tpu_custom_call.1} parent=5 // pred_region
        %s1055 = ssub.s32 %s26, 2
        // Predicated region
        $region97: #{tpu_custom_call.1} parent=95 // pred_check
          %p1056 = pneg %p375
        $region98: #{tpu_custom_call.1} parent=95 // pred_check_branch
          %1058 = sbr.rel (%p1056) target = $region100
        $region99: #{tpu_custom_call.1} parent=95 // pred_region
          %s1059 = sand.u32 %s360, 1
          %s1060 = scalar_lea.sflag [#allocation4], %s1059
          %s1061 = sand.u32 %s360, 1
          %s1062 = smul.addr %s1061, 8
          %s1063 = scalar_lea.vmem [#allocation7], %s1062
          %1065 = dma.done %s1060, 128
        $region100: #{tpu_custom_call.1} parent=95 // pred_fallthru
          _
      $region96: #{tpu_custom_call.1} parent=5 // pred_fallthru
        _
    $region6: #{tpu_custom_call.1} parent=1 // loop_footer
      %s30 = sadd.s32 1, %s26
    $region7: #{tpu_custom_call.1} parent=1 // loop_footer_branch
      %25 = sbr.rel target = $region3
    $region8: #{tpu_custom_call.1} parent=1 // loop_exit
      _
    %1066 = vsyncpa [#allocation3], 1
    %s1067 = scalar_lea.sflag [#allocation3], 1
    %1068 = vsyncpa %s1067, 1
    %1069 = vsyncpa [#allocation6], 1
    %1070 = vsyncpa [#allocation4], 1
    %s1071 = scalar_lea.sflag [#allocation4], 1
    %1072 = vsyncpa %s1071, 1

</llo_original>
